<compile_context>
chip_gen: v7x
topology: tpu7x:2x2x1
jax: 0.10.0
libtpu: 0.0.40
codegen_flags: <defaults>
</compile_context>

<pallas_src>
import functools

import jax
import jax.numpy as jnp
from jax.experimental import pallas as pl
from jax.experimental.pallas import tpu as pltpu


_VMEM = pl.BlockSpec(memory_space=pltpu.MemorySpace.VMEM)   # whole array in VMEM
_COMPILER_PARAMS = pltpu.CompilerParams(vmem_limit_bytes=32 * 1024 * 1024)


# ----------------------------------------------------------------------------
# The fused network kernel
# ----------------------------------------------------------------------------
def _resnet_kernel(x_ref,
                   ws_ref, bs_ref,
                   w11_ref, b11_ref, w12_ref, b12_ref,
                   w21_ref, b21_ref, w22_ref, b22_ref, wd2_ref, bd2_ref,
                   w31_ref, b31_ref, w32_ref, b32_ref, wd3_ref, bd3_ref,
                   w41_ref, b41_ref, w42_ref, b42_ref, wd4_ref, bd4_ref,
                   m16_ref, m8_ref, s4_ref, s2_ref,
                   d16_ref, d8_ref, d4_ref,
                   pool_ref, wfc_ref, bfc_ref,
                   out_ref,
                   *, roll_sign=1, w_full=16, w_half=8):
    f32 = jnp.float32
    relu = lambda v: jnp.maximum(v, 0.0)
    dot = lambda a, b: jnp.dot(a, b, preferred_element_type=f32)

    def conv_roll(x, w_ref, mask_ref, width):
        """3x3 / pad=1 / stride=1 conv: 9 lane-rolled + masked taps, each
        contracted over Cin on the MXU into an f32 accumulator."""
        cout, m = w_ref.shape[1], x.shape[1]
        acc = jnp.zeros((cout, m), f32)
        for t in range(9):
            di, dj = divmod(t, 3)
            delta = (di - 1) * width + (dj - 1)
            if delta == 0:
                tap = x                                      # centre tap: no shift/mask
            else:
                shift = (-roll_sign * delta) % m
                tap = pltpu.roll(x, shift=shift, axis=1) * mask_ref[t]
            acc = acc + dot(w_ref[t], tap)
        return acc

    def conv_select(x, w_ref, s_ref):
        """3x3 / pad=1 / stride=1 conv for tiny M: taps via one-hot (M, M)
        selection matmuls (shift + zero-padding folded into the matrix)."""
        cout, m = w_ref.shape[1], x.shape[1]
        acc = jnp.zeros((cout, m), f32)
        for t in range(9):
            tap = x if t == 4 else dot(x, s_ref[t])
            acc = acc + dot(w_ref[t], tap)
        return acc

    x0 = x_ref[...]                                                    # (Cin, 512)

    # ---- stem: conv3x3 + bn + relu (16x16) ----
    h = relu(conv_roll(x0, ws_ref, m16_ref, w_full) + bs_ref[...])     # (8, 512)

    # ---- layer1 (stride 1, 8 -> 8) ----
    idn = h
    h1 = relu(conv_roll(h, w11_ref, m16_ref, w_full) + b11_ref[...])
    h = relu(conv_roll(h1, w12_ref, m16_ref, w_full) + b12_ref[...] + idn)

    # ---- layer2 (stride 2, 8 -> 16): conv at full res, then compact 16x16 -> 8x8 ----
    d16 = d16_ref[...]
    h1 = relu(dot(conv_roll(h, w21_ref, m16_ref, w_full), d16) + b21_ref[...])   # (16, 128)
    idn = dot(wd2_ref[...], dot(h, d16)) + bd2_ref[...]                           # (16, 128)
    h = relu(conv_roll(h1, w22_ref, m8_ref, w_half) + b22_ref[...] + idn)         # (16, 128)

    # ---- layer3 (stride 2, 16 -> 32): 8x8 -> 4x4 ----
    d8 = d8_ref[...]
    h1 = relu(dot(conv_roll(h, w31_ref, m8_ref, w_half), d8) + b31_ref[...])      # (32, 32)
    idn = dot(wd3_ref[...], dot(h, d8)) + bd3_ref[...]                            # (32, 32)
    h = relu(conv_select(h1, w32_ref, s4_ref) + b32_ref[...] + idn)               # (32, 32)

    # ---- layer4 (stride 2, 32 -> 64): 4x4 -> 2x2 ----
    d4 = d4_ref[...]
    h1 = relu(dot(conv_select(h, w41_ref, s4_ref), d4) + b41_ref[...])            # (64, 8)
    idn = dot(wd4_ref[...], dot(h, d4)) + bd4_ref[...]                            # (64, 8)
    h = relu(conv_select(h1, w42_ref, s2_ref) + b42_ref[...] + idn)               # (64, 8)

    # ---- global average pool + fc (fused; never leaves VMEM) ----
    pooled = dot(h, pool_ref[...])                                     # (64, N)
    out_ref[...] = dot(wfc_ref[...], pooled) + bfc_ref[...]            # (10, N)


# ----------------------------------------------------------------------------
# pltpu.roll direction probe (one-time, outside the jitted forward)
# ----------------------------------------------------------------------------
def _detect_roll_sign():
    """pltpu.roll is expected to follow jnp.roll semantics (out[i] = x[i - shift]).
    Probe once so a semantics flip cannot silently corrupt the conv taps."""
    def probe(x_ref, o_ref):
        o_ref[...] = pltpu.roll(x_ref[...], shift=1, axis=1)
    x = jnp.arange(128, dtype=jnp.float32).reshape(1, 128)
    y = pl.pallas_call(probe,
                       out_shape=jax.ShapeDtypeStruct((1, 128), jnp.float32),
                       in_specs=[_VMEM], out_specs=_VMEM,
                       compiler_params=_COMPILER_PARAMS)(x)
    v = float(y[0, 0])
    if v == 127.0:
        return 1          # jnp.roll semantics
    if v == 1.0:
        return -1         # flipped semantics
    raise RuntimeError("unexpected pltpu.roll behaviour")


# ----------------------------------------------------------------------------
# One-time prepare step: fold BN / alpha into weights, build masks & one-hot
# selection / compaction / pooling matrices.  Hoisted out of the forward.
# ----------------------------------------------------------------------------
def bn_fold(gamma, beta, mean, var, eps=1e-5):
    s = gamma / jnp.sqrt(var + eps)
    return s, beta - mean * s


def _fold_taps(w_oihw, scale, alpha=None):
    """(Cout,Cin,3,3) conv weight -> (9, Cout, Cin) f32 with BN scale and the
    conv_tsa_up alpha (centre tap) folded in.  Tap order t = di*3 + dj."""
    w = w_oihw
    if alpha is not None:
        w = w.at[:, :, 1, 1].add(alpha[:, :, 0, 0])
    w = w * scale[:, None, None, None]
    cout, cin = w.shape[0], w.shape[1]
    return jnp.transpose(w, (2, 3, 0, 1)).reshape(9, cout, cin).astype(jnp.float32)


def _fold_1x1(w_oihw, scale):
    return (w_oihw[:, :, 0, 0] * scale[:, None]).astype(jnp.float32)


def _col(b):
    return b.reshape(-1, 1).astype(jnp.float32)


def _pos_ij(n, h, w):
    idx = jnp.arange(n * h * w)
    return (idx // w) % h, idx % w


def _make_roll_masks(n, h, w):
    """(9, 1, M) validity masks for lane-rolled taps (zero-padding at borders)."""
    i, j = _pos_ij(n, h, w)
    rows = []
    for t in range(9):
        di, dj = divmod(t, 3)
        rows.append((i + di - 1 >= 0) & (i + di - 1 < h) &
                    (j + dj - 1 >= 0) & (j + dj - 1 < w))
    return jnp.stack(rows).astype(jnp.float32)[:, None, :]


def _make_tap_select(n, h, w):
    """(9, M, M) one-hot matrices: tap_t = x @ S_t (shift + padding folded in)."""
    m = n * h * w
    i, j = _pos_ij(n, h, w)
    dst = jnp.arange(m)
    mats = []
    for t in range(9):
        di, dj = divmod(t, 3)
        valid = ((i + di - 1 >= 0) & (i + di - 1 < h) &
                 (j + dj - 1 >= 0) & (j + dj - 1 < w))
        src = dst + (di - 1) * w + (dj - 1)
        mats.append(((jnp.arange(m)[:, None] == src[None, :]) &
                     valid[None, :]).astype(jnp.float32))
    return jnp.stack(mats)


def _make_compaction(n, h, w):
    """(M_in, M_out) one-hot matrix selecting the even (stride-2) positions."""
    ho, wo = h // 2, w // 2
    dst = jnp.arange(n * ho * wo)
    nn, io, jo = dst // (ho * wo), (dst // wo) % ho, dst % wo
    src = nn * h * w + 2 * io * w + 2 * jo
    return (jnp.arange(n * h * w)[:, None] == src[None, :]).astype(jnp.float32)


def _make_pool(n, ho, wo):
    """(M, N) matrix implementing the per-image global average pool."""
    img = jnp.arange(n * ho * wo) // (ho * wo)
    return (img[:, None] == jnp.arange(n)[None, :]).astype(jnp.float32) / (ho * wo)


def prepare_resnet_tsa_plus(params, batch, height, width):
    n, h, w = batch, height, width
    s0, b0 = params['stem_bn']
    args = [_fold_taps(params['stem_w'], s0), _col(b0)]
    for name in ('layer1', 'layer2', 'layer3', 'layer4'):
        p = params[name]
        s1, b1 = p['bn1']
        s2, b2 = p['bn2']
        args += [_fold_taps(p['conv1_w'], s1, p['alpha1']), _col(b1),
                 _fold_taps(p['conv2_w'], s2, p['alpha2']), _col(b2)]
        if 'ds_w' in p:
            sd, bd = p['ds_bn']
            args += [_fold_1x1(p['ds_w'], sd), _col(bd)]
    args += [_make_roll_masks(n, h, w),                  # 16x16 tap masks
             _make_roll_masks(n, h // 2, w // 2),        # 8x8 tap masks
             _make_tap_select(n, h // 4, w // 4),        # 4x4 tap selection
             _make_tap_select(n, h // 8, w // 8),        # 2x2 tap selection
             _make_compaction(n, h, w),                  # 16x16 -> 8x8
             _make_compaction(n, h // 2, w // 2),        # 8x8  -> 4x4
             _make_compaction(n, h // 4, w // 4),        # 4x4  -> 2x2
             _make_pool(n, h // 8, w // 8),
             params['fc_w'].astype(jnp.float32),
             params['fc_b'].reshape(-1, 1).astype(jnp.float32)]
    return tuple(args)


# ----------------------------------------------------------------------------
# Forward: one transpose/reshape of the input, one pallas_call, one transpose.
# ----------------------------------------------------------------------------
def resnet_tsa_plus_forward(prepped, x_nchw, *, roll_sign=1):
    n, c, h, w = x_nchw.shape
    xc = (jnp.transpose(x_nchw, (1, 0, 2, 3))
          .reshape(c, n * h * w).astype(jnp.float32))             # (Cin, N*H*W)
    num_classes = prepped[-2].shape[0]
    kern = functools.partial(_resnet_kernel, roll_sign=roll_sign,
                             w_full=w, w_half=w // 2)
    logits = pl.pallas_call(
        kern,
        out_shape=jax.ShapeDtypeStruct((num_classes, n), jnp.float32),
        in_specs=[_VMEM] * (1 + len(prepped)),
        out_specs=_VMEM,
        compiler_params=_COMPILER_PARAMS,
    )(xc, *prepped)
    return logits.T                                               # (N, num_classes)


# ----------------------------------------------------------------------------
# Deterministic synthetic parameters (shapes per the modules' __init__)
# ----------------------------------------------------------------------------
def make_bn_params(key, c):
    k1, k2, k3, k4 = jax.random.split(key, 4)
    gamma = 1.0 + 0.1 * jax.random.normal(k1, (c,))
    beta = 0.1 * jax.random.normal(k2, (c,))
    mean = 0.1 * jax.random.normal(k3, (c,))
    var = 1.0 + 0.1 * jax.random.uniform(k4, (c,))
    return bn_fold(gamma, beta, mean, var)


def make_block_params(key, cin, cout, stride):
    ks = jax.random.split(key, 6)
    p = {
        'conv1_w': 0.1 * jax.random.normal(ks[0], (cout, cin, 3, 3)),
        'alpha1': jnp.ones((cout, cin, 1, 1)),     # conv_tsa_up alpha = torch.ones
        'bn1': make_bn_params(ks[1], cout),
        'conv2_w': 0.1 * jax.random.normal(ks[2], (cout, cout, 3, 3)),
        'alpha2': jnp.ones((cout, cout, 1, 1)),
        'bn2': make_bn_params(ks[3], cout),
    }
    if stride != 1 or cin != cout:
        p['ds_w'] = 0.1 * jax.random.normal(ks[4], (cout, cin, 1, 1))
        p['ds_bn'] = make_bn_params(ks[5], cout)
    return p


def make_resnet_tsa_plus_params(key, in_ch=4, base=8, num_classes=10):
    ks = jax.random.split(key, 8)
    return {
        'stem_w': 0.1 * jax.random.normal(ks[0], (base, in_ch, 3, 3)),
        'stem_bn': make_bn_params(ks[1], base),
        'layer1': make_block_params(ks[2], base, base, 1),
        'layer2': make_block_params(ks[3], base, 2 * base, 2),
        'layer3': make_block_params(ks[4], 2 * base, 4 * base, 2),
        'layer4': make_block_params(ks[5], 4 * base, 8 * base, 2),
        'fc_w': 0.1 * jax.random.normal(ks[6], (num_classes, 8 * base)),
        'fc_b': 0.1 * jax.random.normal(ks[7], (num_classes,)),
    }


if __name__ == "__main__":
    key = jax.random.PRNGKey(0)
    pkey, xkey = jax.random.split(key)
    params = make_resnet_tsa_plus_params(pkey, in_ch=4, base=8, num_classes=10)
    x = jax.random.normal(xkey, (2, 4, 16, 16), dtype=jnp.float32)     # NCHW input

    roll_sign = _detect_roll_sign()                  # one-time semantics probe
    prepped = prepare_resnet_tsa_plus(params, batch=2, height=16, width=16)

    fwd = jax.jit(functools.partial(resnet_tsa_plus_forward, roll_sign=roll_sign))
    out = fwd(prepped, x)
    jax.block_until_ready(out)
    assert out.shape == (2, 10)
    print("KERNEL_OK")
</pallas_src>

<mosaic_0001>
module attributes {stable_mosaic.version = 11 : i64} {
  func.func @probe(%arg0: memref<1x128xf32, #tpu.memory_space<vmem>>, %arg1: memref<1x128xf32, #tpu.memory_space<vmem>>) attributes {dimension_semantics = [], scalar_prefetch = 0 : i64, scratch_operands = 0 : i64, tpu.core_type = #tpu.core_type<tc>} {
    %c0 = arith.constant 0 : index
    %c0_0 = arith.constant 0 : index
    %0 = vector.load %arg0[%c0, %c0_0] : memref<1x128xf32, #tpu.memory_space<vmem>>, vector<1x128xf32>
    %c1_i32 = arith.constant 1 : i32
    %1 = tpu.dynamic_rotate %0 by %c1_i32 dim 1 : vector<1x128xf32>, i32 -> vector<1x128xf32>
    %c0_1 = arith.constant 0 : index
    %c0_2 = arith.constant 0 : index
    %2 = vector.load %arg1[%c0_1, %c0_2] : memref<1x128xf32, #tpu.memory_space<vmem>>, vector<1x128xf32>
    tpu.vector_store %arg1[%c0_1, %c0_2], %1 {strides = array<i32>} : memref<1x128xf32, #tpu.memory_space<vmem>>, vector<1x128xf32>,
    return
  }
}

</mosaic_0001>

<llo_original>
// kernel: tpu_custom_call.1
$region0: #{tpu_custom_call.1}
  #allocation0 [shape = 'u32[]', space=smem, size = 0x4, offset = 0x4, fixed_abs, tag = 'smem constant byte address 0x4 - core index']
  #allocation1 [shape = 'u32[144,128]{1,0:T(1,128)}', space=vmem, size = 0x12000, scoped, tag = 'internal scratch']
  %s0 = inlined_call_operand.hbm [shape: f32[1,128], index: 0, kind: input, shape index: {}]
  %s1 = inlined_call_operand.hbm [shape: f32[1,128], index: 1, kind: output, shape index: {}]
  %s2 = sld [smem:[#allocation0]]
  $region18: #{tpu_custom_call.1} parent=0
    _
  %s4 = ssub.s32 1, %s2
  %s5 = scalar_select 0, %s4, %s2
  $region1: #{tpu_custom_call.1} parent=0
    #allocation2 [shape = 'u8[512]{0}', space=vmem, size = 0x400, scoped, tag = 'input window, operand 0, single buffered']
    #allocation3 [shape = 's32[1]{0}', space=sflag, size = 0x4, scoped, tag = 'scoped memory for tpu_custom_call.1']
    #allocation4 [shape = 's32[1]{0}', space=sflag, size = 0x4, scoped, tag = 'scoped memory for tpu_custom_call.1']
    #allocation5 [shape = 'u8[512]{0}', space=vmem, size = 0x400, scoped, tag = 'output window, operand 0, single buffered']
    %6 = vsyncpa [#allocation3], 0
    %7 = vsyncpa [#allocation4], 0
    // Predicated region
    $region2: #{tpu_custom_call.1} parent=1 // pred_check
      _
    $region3: #{tpu_custom_call.1} parent=1 // pred_check_branch
      %9 = sbr.rel (0) target = $region5
    $region4: #{tpu_custom_call.1} parent=1 // pred_region
      %s11 = ssub.s32 16, 16
      %12 = vsyncadd [#allocation3], %s11
      %s14 = sshll.u32 [#allocation2], 4
      %s15 = int_to_ptr.vmem [resolvable:$true] %s14
      %17 = dma.hbm_to_vmem [thread:$0]  %s0, 16, %s15, [#allocation3]
    $region5: #{tpu_custom_call.1} parent=1 // pred_fallthru
      _
    // Predicated region
    $region6: #{tpu_custom_call.1} parent=1 // pred_check
      _
    $region7: #{tpu_custom_call.1} parent=1 // pred_check_branch
      %19 = sbr.rel (0) target = $region9
    $region8: #{tpu_custom_call.1} parent=1 // pred_region
      %20 = dma.done [#allocation3], 16
    $region9: #{tpu_custom_call.1} parent=1 // pred_fallthru
      _
    %v21 = vld [vmem:[#allocation2] sm:$0x1]
    %22 = vrot.lane.b32.xlu0 %v21, 1
    %v23 = vpop.permute.xlu0 %22
    %24 = vst [vmem:[#allocation5] sm:$0x1] %v23
    // Predicated region
    $region10: #{tpu_custom_call.1} parent=1 // pred_check
      _
    $region11: #{tpu_custom_call.1} parent=1 // pred_check_branch
      %26 = sbr.rel (0) target = $region13
    $region12: #{tpu_custom_call.1} parent=1 // pred_region
      %s28 = ssub.s32 16, 16
      %29 = vsyncadd [#allocation4], %s28
      %s31 = sshll.u32 [#allocation5], 4
      %s32 = int_to_ptr.vmem [resolvable:$true] %s31
      %34 = dma.vmem_to_hbm [thread:$0]  %s32, 16, %s1, [#allocation4]
    $region13: #{tpu_custom_call.1} parent=1 // pred_fallthru
      _
    // Predicated region
    $region14: #{tpu_custom_call.1} parent=1 // pred_check
      _
    $region15: #{tpu_custom_call.1} parent=1 // pred_check_branch
      %36 = sbr.rel (0) target = $region17
    $region16: #{tpu_custom_call.1} parent=1 // pred_region
      %37 = dma.done [#allocation4], 16
    $region17: #{tpu_custom_call.1} parent=1 // pred_fallthru
      _
    %38 = vsyncpa [#allocation3], 1
    %39 = vsyncpa [#allocation4], 1

</llo_original>
